<compile_context>
chip_gen: v7x
topology: tpu7x:2x2x1
jax: 0.10.0
libtpu: 0.0.40
codegen_flags: <defaults>
</compile_context>

<pallas_src>
import functools

import numpy as np
import jax
import jax.numpy as jnp
from jax.experimental import pallas as pl
from jax.experimental.pallas import tpu as pltpu


# --------------------------------------------------------------------------- #
# Kernels
# --------------------------------------------------------------------------- #
def _resident_gather_kernel(eff_ref, feat_ref, out_ref, *, rows_per_step):
    """feat_ref: full (N, T, D) table resident in VMEM; out_ref: (G, T, D) block."""
    i = pl.program_id(0)
    for r in range(rows_per_step):
        row = eff_ref[i * rows_per_step + r]      # SMEM scalar read
        out_ref[r] = feat_ref[row]                # VMEM dynamic-slice gather


def _stream_gather_kernel(eff_ref, *refs, rows_per_step):
    """refs = rows_per_step gathered (1, T, D) slabs + one (G, T, D) output block."""
    del eff_ref                                   # consumed by the index_maps
    out_ref = refs[-1]
    for r in range(rows_per_step):
        out_ref[r] = refs[r][0]


# --------------------------------------------------------------------------- #
# Helpers
# --------------------------------------------------------------------------- #
def _vmem_capacity_bytes() -> int:
    try:
        cap = getattr(pltpu.get_tpu_info(), "vmem_capacity_bytes", None)
        if cap:
            return int(cap)
    except Exception:
        pass
    return 64 * 1024 * 1024  # conservative: v7x per-TensorCore VMEM


def _block_spec(shape, index_map, buffers=None):
    """BlockSpec with optional explicit pipelining depth."""
    if buffers is None:
        return pl.BlockSpec(shape, index_map)
    return pl.BlockSpec(shape, index_map, pipeline_mode=pl.Buffered(buffers))


# --------------------------------------------------------------------------- #
# Pallas wrapper
# --------------------------------------------------------------------------- #
def pann_lookup_batch(feature_table: jax.Array,
                      effective_idx: jax.Array,
                      *,
                      rows_per_step: int = 8,
                      vmem_budget_bytes: int | None = None,
                      force_streaming: bool = False) -> jax.Array:
    """Gather rows: out[b] = feature_table[effective_idx[b]]  -> (B, T, D)."""
    n, t, d = feature_table.shape
    itemsize = jnp.dtype(feature_table.dtype).itemsize
    eff = jnp.asarray(effective_idx, dtype=jnp.int32).reshape(-1)
    b = int(eff.shape[0])
    assert b >= 1, "empty index batch"

    gsz = int(max(1, min(rows_per_step, b)))      # rows gathered per grid step
    steps = -(-b // gsz)
    b_pad = steps * gsz
    if b_pad != b:                                # pad with a safe valid row id
        eff = jnp.concatenate([eff, jnp.zeros((b_pad - b,), jnp.int32)])

    if vmem_budget_bytes is None:
        vmem_budget_bytes = int(0.7 * _vmem_capacity_bytes())

    table_bytes = n * t * d * itemsize
    out_block_bytes = gsz * t * d * itemsize
    # Budget check assumes 2x table in case the compiler ignores Buffered(1).
    resident_ok = 2 * table_bytes + 2 * out_block_bytes + (4 << 20) <= vmem_budget_bytes
    use_resident = resident_ok and not force_streaming

    dim_sem = ("parallel",) if steps >= 8 else ("arbitrary",)

    def _call(table_buffers, stream_buffers):
        if use_resident:
            kernel = functools.partial(_resident_gather_kernel, rows_per_step=gsz)
            in_specs = [_block_spec((n, t, d), lambda i, eff_ref: (0, 0, 0),
                                    buffers=table_buffers)]
            operands = (eff, feature_table)
            bytes_accessed = table_bytes + b_pad * t * d * itemsize + 4 * b_pad
            vmem_limit = min(
                _vmem_capacity_bytes(),
                max(32 << 20, 2 * table_bytes + 4 * out_block_bytes + (4 << 20)))
        else:
            kernel = functools.partial(_stream_gather_kernel, rows_per_step=gsz)

            def make_map(r):
                return lambda i, eff_ref: (eff_ref[i * gsz + r], 0, 0)

            in_specs = [_block_spec((1, t, d), make_map(r), buffers=stream_buffers)
                        for r in range(gsz)]
            operands = (eff,) + (feature_table,) * gsz
            bytes_accessed = 2 * b_pad * t * d * itemsize + 4 * b_pad
            vmem_limit = None

        grid_spec = pltpu.PrefetchScalarGridSpec(
            num_scalar_prefetch=1,
            grid=(steps,),
            in_specs=in_specs,
            out_specs=pl.BlockSpec((gsz, t, d), lambda i, eff_ref: (i, 0, 0)),
        )
        cp_kwargs = dict(dimension_semantics=dim_sem)
        if vmem_limit is not None:
            cp_kwargs["vmem_limit_bytes"] = int(vmem_limit)

        return pl.pallas_call(
            kernel,
            grid_spec=grid_spec,
            out_shape=jax.ShapeDtypeStruct((b_pad, t, d), feature_table.dtype),
            compiler_params=pltpu.CompilerParams(**cp_kwargs),
            cost_estimate=pl.CostEstimate(flops=0, transcendentals=0,
                                          bytes_accessed=int(bytes_accessed)),
        )(*operands)

    try:
        # Preferred: single-buffer the resident table / triple-buffer row fetches.
        out = jax.block_until_ready(_call(table_buffers=1, stream_buffers=3))
    except Exception:
        # Fallback to default double-buffering if explicit Buffered() is rejected.
        out = jax.block_until_ready(_call(table_buffers=None, stream_buffers=None))

    return out[:b] if b_pad != b else out


def pann_forward(feature_table: jax.Array, remap: jax.Array, indices,
                 **kwargs) -> jax.Array:
    """Batched equivalent of PANN.forward: out[b] == forward(indices[b])[0]."""
    n = feature_table.shape[0]
    idx = jnp.asarray(indices, dtype=jnp.int32).reshape(-1)
    # TODO(synk): PyTorch raises on bad dict keys; here OOB indices are clamped.
    idx = jnp.clip(idx, 0, n - 1)
    eff = jnp.clip(remap[idx], 0, n - 1)          # fold chained nan-row remap on host
    return pann_lookup_batch(feature_table, eff, **kwargs)


def pann_forward_single(feature_table: jax.Array, remap: jax.Array, index,
                        **kwargs) -> jax.Array:
    """Exact PyTorch forward: (1, T, D) for a single index (unsqueeze(0))."""
    return pann_forward(feature_table, remap, jnp.asarray([index]), **kwargs)


def build_pann_params(num_items: int, t: int, d: int, nan_rows):
    """Deterministic in-script replacement for np.load(feats_dir) / nan_rows."""
    key = jax.random.PRNGKey(0)
    table = jax.random.normal(key, (num_items, t, d), dtype=jnp.float32)

    # nan_rows handling from __init__: feature_dict[i] = feature_dict[i - 1],
    # applied sequentially, so consecutive NaN rows CHAIN back to the last
    # valid row.  Replicated via remap[i] = remap[i - 1] in the same order.
    remap_np = np.arange(num_items, dtype=np.int32)
    if nan_rows is not None:
        for i in nan_rows:
            # TODO(synk): i == 0 would index feature_dict[-1] (KeyError) in PyTorch;
            # we clamp to row 0 instead.
            remap_np[i] = remap_np[max(i - 1, 0)]
    remap = jnp.asarray(np.clip(remap_np, 0, num_items - 1))
    return table, remap


if __name__ == "__main__":
    NUM_ITEMS, T, D = 16, 8, 128          # small, (8,128)-aligned feature slabs
    NAN_ROWS = [3, 4, 7]                  # 3 and 4 consecutive -> chaining case

    table, remap = build_pann_params(NUM_ITEMS, T, D, NAN_ROWS)
    table_np, remap_np = np.asarray(table), np.asarray(remap)

    indices = jnp.asarray([5, 7, 3, 4, 0, 15], dtype=jnp.int32)
    idx_np = np.asarray(indices)
    ref = table_np[remap_np[idx_np]]      # PyTorch feature_dict[idx] per row

    # Resident-table fast path (64 KiB table -> fits VMEM on every generation).
    out = pann_forward(table, remap, indices)
    assert out.shape == (idx_np.shape[0], T, D) and out.dtype == jnp.float32
    np.testing.assert_allclose(np.asarray(out), ref, rtol=0.0, atol=0.0)

    # Streaming (data-dependent BlockSpec) path, used when the table exceeds VMEM.
    # rows_per_step=4 with B=6 also exercises the host-side padding.
    out_s = pann_forward(table, remap, indices,
                         force_streaming=True, rows_per_step=4)
    np.testing.assert_allclose(np.asarray(out_s), ref, rtol=0.0, atol=0.0)

    # Single-index path matches PyTorch forward's unsqueeze(0) output exactly.
    out1 = pann_forward_single(table, remap, 7)
    assert out1.shape == (1, T, D) and out1.dtype == jnp.float32
    np.testing.assert_allclose(np.asarray(out1[0]), table_np[remap_np[7]],
                               rtol=0.0, atol=0.0)

    print("KERNEL_OK")
</pallas_src>

<mosaic_0001>
module attributes {stable_mosaic.version = 11 : i64} {
  func.func @_resident_gather_kernel(%arg0: i32, %arg1: memref<6xi32, #tpu.memory_space<smem>>, %arg2: memref<16x8x128xf32, #tpu.memory_space<vmem>>, %arg3: memref<6x8x128xf32, #tpu.memory_space<vmem>>) attributes {dimension_semantics = [#tpu.dimension_semantics<arbitrary>], iteration_bounds = array<i64: 1>, scalar_prefetch = 1 : i64, scratch_operands = 0 : i64, tpu.core_type = #tpu.core_type<tc>, window_params = [{pipeline_mode = #tpu.pipeline_mode<synchronous>, transform_indices = @transform_0, window_bounds = array<i64: 16, 8, 128>}, {transform_indices = @transform_1, window_bounds = array<i64: 6, 8, 128>}]} {
    %c6_i32 = arith.constant 6 : i32
    %0 = arith.muli %arg0, %c6_i32 : i32
    %c0_i32 = arith.constant 0 : i32
    %1 = arith.addi %0, %c0_i32 : i32
    %2 = arith.index_cast %1 : i32 to index
    %3 = memref.load %arg1[%2] : memref<6xi32, #tpu.memory_space<smem>>
    %4 = arith.index_cast %3 : i32 to index
    %c0 = arith.constant 0 : index
    %c0_0 = arith.constant 0 : index
    %5 = vector.load %arg2[%4, %c0, %c0_0] : memref<16x8x128xf32, #tpu.memory_space<vmem>>, vector<1x8x128xf32>
    %6 = vector.shape_cast %5 : vector<1x8x128xf32> to vector<8x128xf32>
    %c0_1 = arith.constant 0 : index
    %c0_2 = arith.constant 0 : index
    %c0_3 = arith.constant 0 : index
    %7 = vector.load %arg3[%c0_1, %c0_2, %c0_3] : memref<6x8x128xf32, #tpu.memory_space<vmem>>, vector<1x8x128xf32>
    %8 = vector.shape_cast %7 : vector<1x8x128xf32> to vector<8x128xf32>
    %9 = vector.shape_cast %6 : vector<8x128xf32> to vector<1x8x128xf32>
    tpu.vector_store %arg3[%c0_1, %c0_2, %c0_3], %9 {strides = array<i32>} : memref<6x8x128xf32, #tpu.memory_space<vmem>>, vector<1x8x128xf32>,
    %c6_i32_4 = arith.constant 6 : i32
    %10 = arith.muli %arg0, %c6_i32_4 : i32
    %c1_i32 = arith.constant 1 : i32
    %11 = arith.addi %10, %c1_i32 : i32
    %12 = arith.index_cast %11 : i32 to index
    %13 = memref.load %arg1[%12] : memref<6xi32, #tpu.memory_space<smem>>
    %14 = arith.index_cast %13 : i32 to index
    %c0_5 = arith.constant 0 : index
    %c0_6 = arith.constant 0 : index
    %15 = vector.load %arg2[%14, %c0_5, %c0_6] : memref<16x8x128xf32, #tpu.memory_space<vmem>>, vector<1x8x128xf32>
    %16 = vector.shape_cast %15 : vector<1x8x128xf32> to vector<8x128xf32>
    %c1 = arith.constant 1 : index
    %c0_7 = arith.constant 0 : index
    %c0_8 = arith.constant 0 : index
    %17 = vector.load %arg3[%c1, %c0_7, %c0_8] : memref<6x8x128xf32, #tpu.memory_space<vmem>>, vector<1x8x128xf32>
    %18 = vector.shape_cast %17 : vector<1x8x128xf32> to vector<8x128xf32>
    %19 = vector.shape_cast %16 : vector<8x128xf32> to vector<1x8x128xf32>
    tpu.vector_store %arg3[%c1, %c0_7, %c0_8], %19 {strides = array<i32>} : memref<6x8x128xf32, #tpu.memory_space<vmem>>, vector<1x8x128xf32>,
    %c6_i32_9 = arith.constant 6 : i32
    %20 = arith.muli %arg0, %c6_i32_9 : i32
    %c2_i32 = arith.constant 2 : i32
    %21 = arith.addi %20, %c2_i32 : i32
    %22 = arith.index_cast %21 : i32 to index
    %23 = memref.load %arg1[%22] : memref<6xi32, #tpu.memory_space<smem>>
    %24 = arith.index_cast %23 : i32 to index
    %c0_10 = arith.constant 0 : index
    %c0_11 = arith.constant 0 : index
    %25 = vector.load %arg2[%24, %c0_10, %c0_11] : memref<16x8x128xf32, #tpu.memory_space<vmem>>, vector<1x8x128xf32>
    %26 = vector.shape_cast %25 : vector<1x8x128xf32> to vector<8x128xf32>
    %c2 = arith.constant 2 : index
    %c0_12 = arith.constant 0 : index
    %c0_13 = arith.constant 0 : index
    %27 = vector.load %arg3[%c2, %c0_12, %c0_13] : memref<6x8x128xf32, #tpu.memory_space<vmem>>, vector<1x8x128xf32>
    %28 = vector.shape_cast %27 : vector<1x8x128xf32> to vector<8x128xf32>
    %29 = vector.shape_cast %26 : vector<8x128xf32> to vector<1x8x128xf32>
    tpu.vector_store %arg3[%c2, %c0_12, %c0_13], %29 {strides = array<i32>} : memref<6x8x128xf32, #tpu.memory_space<vmem>>, vector<1x8x128xf32>,
    %c6_i32_14 = arith.constant 6 : i32
    %30 = arith.muli %arg0, %c6_i32_14 : i32
    %c3_i32 = arith.constant 3 : i32
    %31 = arith.addi %30, %c3_i32 : i32
    %32 = arith.index_cast %31 : i32 to index
    %33 = memref.load %arg1[%32] : memref<6xi32, #tpu.memory_space<smem>>
    %34 = arith.index_cast %33 : i32 to index
    %c0_15 = arith.constant 0 : index
    %c0_16 = arith.constant 0 : index
    %35 = vector.load %arg2[%34, %c0_15, %c0_16] : memref<16x8x128xf32, #tpu.memory_space<vmem>>, vector<1x8x128xf32>
    %36 = vector.shape_cast %35 : vector<1x8x128xf32> to vector<8x128xf32>
    %c3 = arith.constant 3 : index
    %c0_17 = arith.constant 0 : index
    %c0_18 = arith.constant 0 : index
    %37 = vector.load %arg3[%c3, %c0_17, %c0_18] : memref<6x8x128xf32, #tpu.memory_space<vmem>>, vector<1x8x128xf32>
    %38 = vector.shape_cast %37 : vector<1x8x128xf32> to vector<8x128xf32>
    %39 = vector.shape_cast %36 : vector<8x128xf32> to vector<1x8x128xf32>
    tpu.vector_store %arg3[%c3, %c0_17, %c0_18], %39 {strides = array<i32>} : memref<6x8x128xf32, #tpu.memory_space<vmem>>, vector<1x8x128xf32>,
    %c6_i32_19 = arith.constant 6 : i32
    %40 = arith.muli %arg0, %c6_i32_19 : i32
    %c4_i32 = arith.constant 4 : i32
    %41 = arith.addi %40, %c4_i32 : i32
    %42 = arith.index_cast %41 : i32 to index
    %43 = memref.load %arg1[%42] : memref<6xi32, #tpu.memory_space<smem>>
    %44 = arith.index_cast %43 : i32 to index
    %c0_20 = arith.constant 0 : index
    %c0_21 = arith.constant 0 : index
    %45 = vector.load %arg2[%44, %c0_20, %c0_21] : memref<16x8x128xf32, #tpu.memory_space<vmem>>, vector<1x8x128xf32>
    %46 = vector.shape_cast %45 : vector<1x8x128xf32> to vector<8x128xf32>
    %c4 = arith.constant 4 : index
    %c0_22 = arith.constant 0 : index
    %c0_23 = arith.constant 0 : index
    %47 = vector.load %arg3[%c4, %c0_22, %c0_23] : memref<6x8x128xf32, #tpu.memory_space<vmem>>, vector<1x8x128xf32>
    %48 = vector.shape_cast %47 : vector<1x8x128xf32> to vector<8x128xf32>
    %49 = vector.shape_cast %46 : vector<8x128xf32> to vector<1x8x128xf32>
    tpu.vector_store %arg3[%c4, %c0_22, %c0_23], %49 {strides = array<i32>} : memref<6x8x128xf32, #tpu.memory_space<vmem>>, vector<1x8x128xf32>,
    %c6_i32_24 = arith.constant 6 : i32
    %50 = arith.muli %arg0, %c6_i32_24 : i32
    %c5_i32 = arith.constant 5 : i32
    %51 = arith.addi %50, %c5_i32 : i32
    %52 = arith.index_cast %51 : i32 to index
    %53 = memref.load %arg1[%52] : memref<6xi32, #tpu.memory_space<smem>>
    %54 = arith.index_cast %53 : i32 to index
    %c0_25 = arith.constant 0 : index
    %c0_26 = arith.constant 0 : index
    %55 = vector.load %arg2[%54, %c0_25, %c0_26] : memref<16x8x128xf32, #tpu.memory_space<vmem>>, vector<1x8x128xf32>
    %56 = vector.shape_cast %55 : vector<1x8x128xf32> to vector<8x128xf32>
    %c5 = arith.constant 5 : index
    %c0_27 = arith.constant 0 : index
    %c0_28 = arith.constant 0 : index
    %57 = vector.load %arg3[%c5, %c0_27, %c0_28] : memref<6x8x128xf32, #tpu.memory_space<vmem>>, vector<1x8x128xf32>
    %58 = vector.shape_cast %57 : vector<1x8x128xf32> to vector<8x128xf32>
    %59 = vector.shape_cast %56 : vector<8x128xf32> to vector<1x8x128xf32>
    tpu.vector_store %arg3[%c5, %c0_27, %c0_28], %59 {strides = array<i32>} : memref<6x8x128xf32, #tpu.memory_space<vmem>>, vector<1x8x128xf32>,
    return
  }
  func.func @transform_0(%arg0: i32, %arg1: memref<6xi32, #tpu.memory_space<smem>>) -> (i32, i32, i32) {
    %c0_i32 = arith.constant 0 : i32
    %c0_i32_0 = arith.constant 0 : i32
    %c0_i32_1 = arith.constant 0 : i32
    %c0_i32_2 = arith.constant 0 : i32
    return %c0_i32, %c0_i32_0, %c0_i32_1 : i32, i32, i32
  }
  func.func @transform_1(%arg0: i32, %arg1: memref<6xi32, #tpu.memory_space<smem>>) -> (i32, i32, i32) {
    %c0_i32 = arith.constant 0 : i32
    %c0_i32_0 = arith.constant 0 : i32
    %c0_i32_1 = arith.constant 0 : i32
    return %arg0, %c0_i32, %c0_i32_0 : i32, i32, i32
  }
}

module attributes {stable_mosaic.version = 11 : i64} {
  func.func @_resident_gather_kernel(%arg0: i32, %arg1: memref<6xi32, #tpu.memory_space<smem>>, %arg2: memref<16x8x128xf32, #tpu.memory_space<vmem>>, %arg3: memref<6x8x128xf32, #tpu.memory_space<vmem>>) attributes {dimension_semantics = [#tpu.dimension_semantics<arbitrary>], iteration_bounds = array<i64: 1>, scalar_prefetch = 1 : i64, scratch_operands = 0 : i64, tpu.core_type = #tpu.core_type<tc>, window_params = [{pipeline_mode = #tpu.pipeline_mode<synchronous>, transform_indices = @transform_0, window_bounds = array<i64: 16, 8, 128>}, {transform_indices = @transform_1, window_bounds = array<i64: 6, 8, 128>}]} {
    %c6_i32 = arith.constant 6 : i32
    %0 = arith.muli %arg0, %c6_i32 : i32
    %c0_i32 = arith.constant 0 : i32
    %1 = arith.addi %0, %c0_i32 : i32
    %2 = arith.index_cast %1 : i32 to index
    %3 = memref.load %arg1[%2] : memref<6xi32, #tpu.memory_space<smem>>
    %4 = arith.index_cast %3 : i32 to index
    %c0 = arith.constant 0 : index
    %c0_0 = arith.constant 0 : index
    %5 = vector.load %arg2[%4, %c0, %c0_0] : memref<16x8x128xf32, #tpu.memory_space<vmem>>, vector<1x8x128xf32>
    %6 = vector.shape_cast %5 : vector<1x8x128xf32> to vector<8x128xf32>
    %c0_1 = arith.constant 0 : index
    %c0_2 = arith.constant 0 : index
    %c0_3 = arith.constant 0 : index
    %7 = vector.load %arg3[%c0_1, %c0_2, %c0_3] : memref<6x8x128xf32, #tpu.memory_space<vmem>>, vector<1x8x128xf32>
    %8 = vector.shape_cast %7 : vector<1x8x128xf32> to vector<8x128xf32>
    %9 = vector.shape_cast %6 : vector<8x128xf32> to vector<1x8x128xf32>
    tpu.vector_store %arg3[%c0_1, %c0_2, %c0_3], %9 {strides = array<i32>} : memref<6x8x128xf32, #tpu.memory_space<vmem>>, vector<1x8x128xf32>,
    %c6_i32_4 = arith.constant 6 : i32
    %10 = arith.muli %arg0, %c6_i32_4 : i32
    %c1_i32 = arith.constant 1 : i32
    %11 = arith.addi %10, %c1_i32 : i32
    %12 = arith.index_cast %11 : i32 to index
    %13 = memref.load %arg1[%12] : memref<6xi32, #tpu.memory_space<smem>>
    %14 = arith.index_cast %13 : i32 to index
    %c0_5 = arith.constant 0 : index
    %c0_6 = arith.constant 0 : index
    %15 = vector.load %arg2[%14, %c0_5, %c0_6] : memref<16x8x128xf32, #tpu.memory_space<vmem>>, vector<1x8x128xf32>
    %16 = vector.shape_cast %15 : vector<1x8x128xf32> to vector<8x128xf32>
    %c1 = arith.constant 1 : index
    %c0_7 = arith.constant 0 : index
    %c0_8 = arith.constant 0 : index
    %17 = vector.load %arg3[%c1, %c0_7, %c0_8] : memref<6x8x128xf32, #tpu.memory_space<vmem>>, vector<1x8x128xf32>
    %18 = vector.shape_cast %17 : vector<1x8x128xf32> to vector<8x128xf32>
    %19 = vector.shape_cast %16 : vector<8x128xf32> to vector<1x8x128xf32>
    tpu.vector_store %arg3[%c1, %c0_7, %c0_8], %19 {strides = array<i32>} : memref<6x8x128xf32, #tpu.memory_space<vmem>>, vector<1x8x128xf32>,
    %c6_i32_9 = arith.constant 6 : i32
    %20 = arith.muli %arg0, %c6_i32_9 : i32
    %c2_i32 = arith.constant 2 : i32
    %21 = arith.addi %20, %c2_i32 : i32
    %22 = arith.index_cast %21 : i32 to index
    %23 = memref.load %arg1[%22] : memref<6xi32, #tpu.memory_space<smem>>
    %24 = arith.index_cast %23 : i32 to index
    %c0_10 = arith.constant 0 : index
    %c0_11 = arith.constant 0 : index
    %25 = vector.load %arg2[%24, %c0_10, %c0_11] : memref<16x8x128xf32, #tpu.memory_space<vmem>>, vector<1x8x128xf32>
    %26 = vector.shape_cast %25 : vector<1x8x128xf32> to vector<8x128xf32>
    %c2 = arith.constant 2 : index
    %c0_12 = arith.constant 0 : index
    %c0_13 = arith.constant 0 : index
    %27 = vector.load %arg3[%c2, %c0_12, %c0_13] : memref<6x8x128xf32, #tpu.memory_space<vmem>>, vector<1x8x128xf32>
    %28 = vector.shape_cast %27 : vector<1x8x128xf32> to vector<8x128xf32>
    %29 = vector.shape_cast %26 : vector<8x128xf32> to vector<1x8x128xf32>
    tpu.vector_store %arg3[%c2, %c0_12, %c0_13], %29 {strides = array<i32>} : memref<6x8x128xf32, #tpu.memory_space<vmem>>, vector<1x8x128xf32>,
    %c6_i32_14 = arith.constant 6 : i32
    %30 = arith.muli %arg0, %c6_i32_14 : i32
    %c3_i32 = arith.constant 3 : i32
    %31 = arith.addi %30, %c3_i32 : i32
    %32 = arith.index_cast %31 : i32 to index
    %33 = memref.load %arg1[%32] : memref<6xi32, #tpu.memory_space<smem>>
    %34 = arith.index_cast %33 : i32 to index
    %c0_15 = arith.constant 0 : index
    %c0_16 = arith.constant 0 : index
    %35 = vector.load %arg2[%34, %c0_15, %c0_16] : memref<16x8x128xf32, #tpu.memory_space<vmem>>, vector<1x8x128xf32>
    %36 = vector.shape_cast %35 : vector<1x8x128xf32> to vector<8x128xf32>
    %c3 = arith.constant 3 : index
    %c0_17 = arith.constant 0 : index
    %c0_18 = arith.constant 0 : index
    %37 = vector.load %arg3[%c3, %c0_17, %c0_18] : memref<6x8x128xf32, #tpu.memory_space<vmem>>, vector<1x8x128xf32>
    %38 = vector.shape_cast %37 : vector<1x8x128xf32> to vector<8x128xf32>
    %39 = vector.shape_cast %36 : vector<8x128xf32> to vector<1x8x128xf32>
    tpu.vector_store %arg3[%c3, %c0_17, %c0_18], %39 {strides = array<i32>} : memref<6x8x128xf32, #tpu.memory_space<vmem>>, vector<1x8x128xf32>,
    %c6_i32_19 = arith.constant 6 : i32
    %40 = arith.muli %arg0, %c6_i32_19 : i32
    %c4_i32 = arith.constant 4 : i32
    %41 = arith.addi %40, %c4_i32 : i32
    %42 = arith.index_cast %41 : i32 to index
    %43 = memref.load %arg1[%42] : memref<6xi32, #tpu.memory_space<smem>>
    %44 = arith.index_cast %43 : i32 to index
    %c0_20 = arith.constant 0 : index
    %c0_21 = arith.constant 0 : index
    %45 = vector.load %arg2[%44, %c0_20, %c0_21] : memref<16x8x128xf32, #tpu.memory_space<vmem>>, vector<1x8x128xf32>
    %46 = vector.shape_cast %45 : vector<1x8x128xf32> to vector<8x128xf32>
    %c4 = arith.constant 4 : index
    %c0_22 = arith.constant 0 : index
    %c0_23 = arith.constant 0 : index
    %47 = vector.load %arg3[%c4, %c0_22, %c0_23] : memref<6x8x128xf32, #tpu.memory_space<vmem>>, vector<1x8x128xf32>
    %48 = vector.shape_cast %47 : vector<1x8x128xf32> to vector<8x128xf32>
    %49 = vector.shape_cast %46 : vector<8x128xf32> to vector<1x8x128xf32>
    tpu.vector_store %arg3[%c4, %c0_22, %c0_23], %49 {strides = array<i32>} : memref<6x8x128xf32, #tpu.memory_space<vmem>>, vector<1x8x128xf32>,
    %c6_i32_24 = arith.constant 6 : i32
    %50 = arith.muli %arg0, %c6_i32_24 : i32
    %c5_i32 = arith.constant 5 : i32
    %51 = arith.addi %50, %c5_i32 : i32
    %52 = arith.index_cast %51 : i32 to index
    %53 = memref.load %arg1[%52] : memref<6xi32, #tpu.memory_space<smem>>
    %54 = arith.index_cast %53 : i32 to index
    %c0_25 = arith.constant 0 : index
    %c0_26 = arith.constant 0 : index
    %55 = vector.load %arg2[%54, %c0_25, %c0_26] : memref<16x8x128xf32, #tpu.memory_space<vmem>>, vector<1x8x128xf32>
    %56 = vector.shape_cast %55 : vector<1x8x128xf32> to vector<8x128xf32>
    %c5 = arith.constant 5 : index
    %c0_27 = arith.constant 0 : index
    %c0_28 = arith.constant 0 : index
    %57 = vector.load %arg3[%c5, %c0_27, %c0_28] : memref<6x8x128xf32, #tpu.memory_space<vmem>>, vector<1x8x128xf32>
    %58 = vector.shape_cast %57 : vector<1x8x128xf32> to vector<8x128xf32>
    %59 = vector.shape_cast %56 : vector<8x128xf32> to vector<1x8x128xf32>
    tpu.vector_store %arg3[%c5, %c0_27, %c0_28], %59 {strides = array<i32>} : memref<6x8x128xf32, #tpu.memory_space<vmem>>, vector<1x8x128xf32>,
    return
  }
  func.func @transform_0(%arg0: i32, %arg1: memref<6xi32, #tpu.memory_space<smem>>) -> (i32, i32, i32) {
    %c0_i32 = arith.constant 0 : i32
    %c0_i32_0 = arith.constant 0 : i32
    %c0_i32_1 = arith.constant 0 : i32
    %c0_i32_2 = arith.constant 0 : i32
    return %c0_i32, %c0_i32_0, %c0_i32_1 : i32, i32, i32
  }
  func.func @transform_1(%arg0: i32, %arg1: memref<6xi32, #tpu.memory_space<smem>>) -> (i32, i32, i32) {
    %c0_i32 = arith.constant 0 : i32
    %c0_i32_0 = arith.constant 0 : i32
    %c0_i32_1 = arith.constant 0 : i32
    return %arg0, %c0_i32, %c0_i32_0 : i32, i32, i32
  }
}

</mosaic_0001>

<llo_original>
// kernel: tpu_custom_call.1
$region0: #{tpu_custom_call.1}
  #allocation0 [shape = 'u32[]', space=smem, size = 0x4, offset = 0x4, fixed_abs, tag = 'smem constant byte address 0x4 - core index']
  #allocation1 [shape = 'u32[144,128]{1,0:T(1,128)}', space=vmem, size = 0x12000, scoped, tag = 'internal scratch']
  #allocation2 [shape = 's32[1]{0}', space=sflag, size = 0x4, scoped, tag = 'scoped memory for tpu_custom_call.1']
  #allocation3 [shape = 'u8[512]{0}', space=smem, size = 0x200, scoped, tag = 'prefetched SMEM operand 0']
  %s0 = inlined_call_operand.hbm [shape: s32[6], index: 0, kind: input, shape index: {}]
  %s1 = inlined_call_operand.hbm [shape: f32[16,8,128], index: 1, kind: input, shape index: {}]
  %s2 = inlined_call_operand.hbm [shape: f32[6,8,128], index: 2, kind: output, shape index: {}]
  %s3 = sld [smem:[#allocation0]]
  $region18: #{tpu_custom_call.1} parent=0
    _
  %s5 = ssub.s32 1, %s3
  %s6 = scalar_select 0, %s5, %s3
  %8 = dma.hbm_to_smem %s0, 16, [#allocation3], [#allocation2]
  %9 = dma.done [#allocation2], 16
  %10 = sfence
  $region1: #{tpu_custom_call.1} parent=0
    #allocation4 [shape = 'u8[65536]{0}', space=vmem, size = 0x10000, scoped, tag = 'input window, operand 1, single buffered']
    #allocation5 [shape = 's32[1]{0}', space=sflag, size = 0x4, scoped, tag = 'scoped memory for tpu_custom_call.1']
    #allocation6 [shape = 's32[1]{0}', space=sflag, size = 0x4, scoped, tag = 'scoped memory for tpu_custom_call.1']
    #allocation7 [shape = 'u8[24576]{0}', space=vmem, size = 0x6000, scoped, tag = 'output window, operand 0, single buffered']
    %11 = vsyncpa [#allocation5], 0
    %12 = vsyncpa [#allocation6], 0
    // Predicated region
    $region2: #{tpu_custom_call.1} parent=1 // pred_check
      _
    $region3: #{tpu_custom_call.1} parent=1 // pred_check_branch
      %14 = sbr.rel (0) target = $region5
    $region4: #{tpu_custom_call.1} parent=1 // pred_region
      %s16 = ssub.s32 2048, 2048
      %17 = vsyncadd [#allocation5], %s16
      %s18 = sshll.u32 [#allocation4], 4
      %s19 = int_to_ptr.vmem [resolvable:$true] %s18
      %24 = dma.hbm_to_vmem [thread:$0]  %s1, 2048, %s19, [#allocation5], 128, 128, 8
    $region5: #{tpu_custom_call.1} parent=1 // pred_fallthru
      _
    // Predicated region
    $region6: #{tpu_custom_call.1} parent=1 // pred_check
      _
    $region7: #{tpu_custom_call.1} parent=1 // pred_check_branch
      %26 = sbr.rel (0) target = $region9
    $region8: #{tpu_custom_call.1} parent=1 // pred_region
      %27 = dma.done [#allocation5], 2048
    $region9: #{tpu_custom_call.1} parent=1 // pred_fallthru
      _
    %s28 = smul.u32 0, 6
    %s29 = sld [smem:[#allocation3 + %s28]]
    %s30 = smul.u32 %s29, 8
    %s31 = scalar_lea.vmem [#allocation4], %s30
    %v32 = vld [vmem:[%s31] sm:$0xff]
    %33 = vst [vmem:[#allocation7] sm:$0xff] %v32
    %s34 = sadd.s32 %s28, 1
    %s35 = sld [smem:[#allocation3 + %s34]]
    %s36 = smul.u32 %s35, 8
    %s37 = scalar_lea.vmem [#allocation4], %s36
    %v38 = vld [vmem:[%s37] sm:$0xff]
    %s39 = scalar_lea.vmem [#allocation7], 8
    %40 = vst [vmem:[%s39] sm:$0xff] %v38
    %s41 = sadd.s32 %s28, 2
    %s42 = sld [smem:[#allocation3 + %s41]]
    %s43 = smul.u32 %s42, 8
    %s44 = scalar_lea.vmem [#allocation4], %s43
    %v45 = vld [vmem:[%s44] sm:$0xff]
    %s46 = scalar_lea.vmem [#allocation7], 16
    %47 = vst [vmem:[%s46] sm:$0xff] %v45
    %s48 = sadd.s32 %s28, 3
    %s49 = sld [smem:[#allocation3 + %s48]]
    %s50 = smul.u32 %s49, 8
    %s51 = scalar_lea.vmem [#allocation4], %s50
    %v52 = vld [vmem:[%s51] sm:$0xff]
    %s53 = scalar_lea.vmem [#allocation7], 24
    %54 = vst [vmem:[%s53] sm:$0xff] %v52
    %s55 = sadd.s32 %s28, 4
    %s56 = sld [smem:[#allocation3 + %s55]]
    %s57 = smul.u32 %s56, 8
    %s58 = scalar_lea.vmem [#allocation4], %s57
    %v59 = vld [vmem:[%s58] sm:$0xff]
    %s60 = scalar_lea.vmem [#allocation7], 32
    %61 = vst [vmem:[%s60] sm:$0xff] %v59
    %s62 = sadd.s32 %s28, 5
    %s63 = sld [smem:[#allocation3 + %s62]]
    %s64 = smul.u32 %s63, 8
    %s65 = scalar_lea.vmem [#allocation4], %s64
    %v66 = vld [vmem:[%s65] sm:$0xff]
    %s67 = scalar_lea.vmem [#allocation7], 40
    %68 = vst [vmem:[%s67] sm:$0xff] %v66
    // Predicated region
    $region10: #{tpu_custom_call.1} parent=1 // pred_check
      _
    $region11: #{tpu_custom_call.1} parent=1 // pred_check_branch
      %70 = sbr.rel (0) target = $region13
    $region12: #{tpu_custom_call.1} parent=1 // pred_region
      %s72 = ssub.s32 768, 768
      %73 = vsyncadd [#allocation6], %s72
      %s74 = sshll.u32 [#allocation7], 4
      %s75 = int_to_ptr.vmem [resolvable:$true] %s74
      %80 = dma.vmem_to_hbm [thread:$0]  %s75, 768, %s2, [#allocation6], 128, 128, 8
    $region13: #{tpu_custom_call.1} parent=1 // pred_fallthru
      _
    // Predicated region
    $region14: #{tpu_custom_call.1} parent=1 // pred_check
      _
    $region15: #{tpu_custom_call.1} parent=1 // pred_check_branch
      %82 = sbr.rel (0) target = $region17
    $region16: #{tpu_custom_call.1} parent=1 // pred_region
      %83 = dma.done [#allocation6], 768
    $region17: #{tpu_custom_call.1} parent=1 // pred_fallthru
      _
    %84 = vsyncpa [#allocation5], 1
    %85 = vsyncpa [#allocation6], 1

// kernel: tpu_custom_call.1
$region0: #{tpu_custom_call.1}
  #allocation0 [shape = 'u32[]', space=smem, size = 0x4, offset = 0x4, fixed_abs, tag = 'smem constant byte address 0x4 - core index']
  #allocation1 [shape = 'u32[144,128]{1,0:T(1,128)}', space=vmem, size = 0x12000, scoped, tag = 'internal scratch']
  #allocation2 [shape = 's32[1]{0}', space=sflag, size = 0x4, scoped, tag = 'scoped memory for tpu_custom_call.1']
  #allocation3 [shape = 'u8[512]{0}', space=smem, size = 0x200, scoped, tag = 'prefetched SMEM operand 0']
  %s0 = inlined_call_operand.hbm [shape: s32[6], index: 0, kind: input, shape index: {}]
  %s1 = inlined_call_operand.hbm [shape: f32[16,8,128], index: 1, kind: input, shape index: {}]
  %s2 = inlined_call_operand.hbm [shape: f32[6,8,128], index: 2, kind: output, shape index: {}]
  %s3 = sld [smem:[#allocation0]]
  $region18: #{tpu_custom_call.1} parent=0
    _
  %s5 = ssub.s32 1, %s3
  %s6 = scalar_select 0, %s5, %s3
  %8 = dma.hbm_to_smem %s0, 16, [#allocation3], [#allocation2]
  %9 = dma.done [#allocation2], 16
  %10 = sfence
  $region1: #{tpu_custom_call.1} parent=0
    #allocation4 [shape = 'u8[65536]{0}', space=vmem, size = 0x10000, scoped, tag = 'input window, operand 1, single buffered']
    #allocation5 [shape = 's32[1]{0}', space=sflag, size = 0x4, scoped, tag = 'scoped memory for tpu_custom_call.1']
    #allocation6 [shape = 's32[1]{0}', space=sflag, size = 0x4, scoped, tag = 'scoped memory for tpu_custom_call.1']
    #allocation7 [shape = 'u8[24576]{0}', space=vmem, size = 0x6000, scoped, tag = 'output window, operand 0, single buffered']
    %11 = vsyncpa [#allocation5], 0
    %12 = vsyncpa [#allocation6], 0
    // Predicated region
    $region2: #{tpu_custom_call.1} parent=1 // pred_check
      _
    $region3: #{tpu_custom_call.1} parent=1 // pred_check_branch
      %14 = sbr.rel (0) target = $region5
    $region4: #{tpu_custom_call.1} parent=1 // pred_region
      %s16 = ssub.s32 2048, 2048
      %17 = vsyncadd [#allocation5], %s16
      %s18 = sshll.u32 [#allocation4], 4
      %s19 = int_to_ptr.vmem [resolvable:$true] %s18
      %24 = dma.hbm_to_vmem [thread:$0]  %s1, 2048, %s19, [#allocation5], 128, 128, 8
    $region5: #{tpu_custom_call.1} parent=1 // pred_fallthru
      _
    // Predicated region
    $region6: #{tpu_custom_call.1} parent=1 // pred_check
      _
    $region7: #{tpu_custom_call.1} parent=1 // pred_check_branch
      %26 = sbr.rel (0) target = $region9
    $region8: #{tpu_custom_call.1} parent=1 // pred_region
      %27 = dma.done [#allocation5], 2048
    $region9: #{tpu_custom_call.1} parent=1 // pred_fallthru
      _
    %s28 = smul.u32 0, 6
    %s29 = sld [smem:[#allocation3 + %s28]]
    %s30 = smul.u32 %s29, 8
    %s31 = scalar_lea.vmem [#allocation4], %s30
    %v32 = vld [vmem:[%s31] sm:$0xff]
    %33 = vst [vmem:[#allocation7] sm:$0xff] %v32
    %s34 = sadd.s32 %s28, 1
    %s35 = sld [smem:[#allocation3 + %s34]]
    %s36 = smul.u32 %s35, 8
    %s37 = scalar_lea.vmem [#allocation4], %s36
    %v38 = vld [vmem:[%s37] sm:$0xff]
    %s39 = scalar_lea.vmem [#allocation7], 8
    %40 = vst [vmem:[%s39] sm:$0xff] %v38
    %s41 = sadd.s32 %s28, 2
    %s42 = sld [smem:[#allocation3 + %s41]]
    %s43 = smul.u32 %s42, 8
    %s44 = scalar_lea.vmem [#allocation4], %s43
    %v45 = vld [vmem:[%s44] sm:$0xff]
    %s46 = scalar_lea.vmem [#allocation7], 16
    %47 = vst [vmem:[%s46] sm:$0xff] %v45
    %s48 = sadd.s32 %s28, 3
    %s49 = sld [smem:[#allocation3 + %s48]]
    %s50 = smul.u32 %s49, 8
    %s51 = scalar_lea.vmem [#allocation4], %s50
    %v52 = vld [vmem:[%s51] sm:$0xff]
    %s53 = scalar_lea.vmem [#allocation7], 24
    %54 = vst [vmem:[%s53] sm:$0xff] %v52
    %s55 = sadd.s32 %s28, 4
    %s56 = sld [smem:[#allocation3 + %s55]]
    %s57 = smul.u32 %s56, 8
    %s58 = scalar_lea.vmem [#allocation4], %s57
    %v59 = vld [vmem:[%s58] sm:$0xff]
    %s60 = scalar_lea.vmem [#allocation7], 32
    %61 = vst [vmem:[%s60] sm:$0xff] %v59
    %s62 = sadd.s32 %s28, 5
    %s63 = sld [smem:[#allocation3 + %s62]]
    %s64 = smul.u32 %s63, 8
    %s65 = scalar_lea.vmem [#allocation4], %s64
    %v66 = vld [vmem:[%s65] sm:$0xff]
    %s67 = scalar_lea.vmem [#allocation7], 40
    %68 = vst [vmem:[%s67] sm:$0xff] %v66
    // Predicated region
    $region10: #{tpu_custom_call.1} parent=1 // pred_check
      _
    $region11: #{tpu_custom_call.1} parent=1 // pred_check_branch
      %70 = sbr.rel (0) target = $region13
    $region12: #{tpu_custom_call.1} parent=1 // pred_region
      %s72 = ssub.s32 768, 768
      %73 = vsyncadd [#allocation6], %s72
      %s74 = sshll.u32 [#allocation7], 4
      %s75 = int_to_ptr.vmem [resolvable:$true] %s74
      %80 = dma.vmem_to_hbm [thread:$0]  %s75, 768, %s2, [#allocation6], 128, 128, 8
    $region13: #{tpu_custom_call.1} parent=1 // pred_fallthru
      _
    // Predicated region
    $region14: #{tpu_custom_call.1} parent=1 // pred_check
      _
    $region15: #{tpu_custom_call.1} parent=1 // pred_check_branch
      %82 = sbr.rel (0) target = $region17
    $region16: #{tpu_custom_call.1} parent=1 // pred_region
      %83 = dma.done [#allocation6], 768
    $region17: #{tpu_custom_call.1} parent=1 // pred_fallthru
      _
    %84 = vsyncpa [#allocation5], 1
    %85 = vsyncpa [#allocation6], 1

</llo_original>
